<compile_context>
chip_gen: v6e
topology: v6e:2x2x1
jax: 0.10.0
libtpu: 0.0.40
codegen_flags: <defaults>
</compile_context>

<pallas_src>
import math

import jax
import jax.numpy as jnp
from jax.experimental import pallas as pl
from jax.experimental.pallas import tpu as pltpu


def _embed_kernel(x_ref, w_ref, pe_ref, o_ref):
    # x_ref : (TB, L, 3C)  im2col'd activations (I/O dtype), TB independent (b, g) slices
    # w_ref : (3C, D)      folded conv taps (matmul dtype == I/O dtype), VMEM-resident
    # pe_ref: (L, D)       sinusoidal positional table slice, f32, VMEM-resident
    # o_ref : (TB, L, D)   output (I/O dtype)
    tb, l, k = x_ref.shape
    d = w_ref.shape[-1]
    # Leading-dims-only reshape (minor dim untouched -> layout-preserving), then one MXU
    # matmul per tile with f32 accumulation.
    x2 = x_ref[...].reshape(tb * l, k)
    y = jnp.dot(x2, w_ref[...], preferred_element_type=jnp.float32)
    # PE is already f32 and resident: add directly, single downcast at the store.
    y = y.reshape(tb, l, d) + pe_ref[...][None, :, :]
    o_ref[...] = y.astype(o_ref.dtype)


def _lane_pad(v):
    return -(-v // 128) * 128


def _sublane_pad(v):
    return -(-v // 8) * 8


def _vmem_limit_bytes():
    """Generation-aware scoped-VMEM limit: half of physical, clamped to [32, 100] MiB."""
    phys = 64 * 1024 * 1024                      # v7x-safe floor if the query is unavailable
    try:
        info = pltpu.get_tpu_info()
        phys = int(getattr(info, "vmem_capacity_bytes", phys))
    except Exception:
        pass
    #   v7x  (64 MiB physical)  -> 32 MiB
    #   v5e/v6e (128 MiB)       -> 64 MiB
    return int(min(max(phys // 2, 32 * 1024 * 1024), 100 * 1024 * 1024))


def _pick_block_rows(n, l, c3, d, io_itemsize, tile_budget_bytes):
    """Number of (b, g) slices per grid step, sized against a VMEM tile budget."""
    in_bytes = l * _lane_pad(c3) * io_itemsize        # one lane-padded input tile slice
    out_bytes = l * _lane_pad(d) * io_itemsize        # one output tile slice
    acc_bytes = l * _lane_pad(d) * 4                  # f32 matmul/PE-add intermediate
    # Double-buffered input AND output tiles + f32 intermediate + operand slack.
    per_slice = 2 * (in_bytes + out_bytes) + acc_bytes + in_bytes
    tb = max(1, min(n, tile_budget_bytes // max(per_slice, 1)))
    # Keep >= 4 grid steps when possible: >= 2 per TensorCore on v7x megacore, and enough
    # steps everywhere for prefetch/writeback overlap (per-step overhead is only ~0.35 us).
    min_steps = min(n, 4)
    if pl.cdiv(n, tb) < min_steps:
        tb = pl.cdiv(n, min_steps)
    return max(1, tb)


def data_embedding(x, weight, pe_table):
    """Forward of DataEmbedding (AllTokenEmbedding + PositionalEmbedding).

    x        : (B, G, L, C) or (B, L, C), float dtype (f32 or bf16).
    weight   : (D, C, 3) Conv1d weight (circular padding, bias=False).
    pe_table : (max_len, D) sinusoidal positional table (f32).
    Returns x's layout with C replaced by D, in x's dtype.
    """
    squeezed = x.ndim == 3
    if squeezed:
        x = x[:, None]
    B, G, L, C = x.shape
    D = weight.shape[0]
    if L > pe_table.shape[0]:
        raise ValueError(f"sequence length {L} exceeds positional table {pe_table.shape[0]}")

    N = B * G
    x_rows = x.reshape(N, L, C)

    # Wrapper-side im2col of the 3 circular taps along L (per-(b,g)-slice rolls, so there
    # is no cross-slice leakage).  Input bytes are ~3C/D of the output bytes => negligible
    # extra HBM traffic, and it keeps all shift/concat work out of the kernel.
    x_cat = jnp.concatenate(
        [jnp.roll(x_rows, 1, axis=1), x_rows, jnp.roll(x_rows, -1, axis=1)], axis=-1)

    # Folded weight: row index k*C + c matches the [x_{t-1}, x_t, x_{t+1}] concat order.
    #   y[t, d] = sum_{k, c} weight[d, c, k] * x[(t + k - 1) % L, c]
    # Matmul operands in the I/O dtype (bf16 straight to the MXU on the bf16 path).
    w_cat = jnp.transpose(weight, (2, 1, 0)).reshape(3 * C, D).astype(x.dtype)
    pe = pe_table[:L, :].astype(jnp.float32)          # resident in f32 (no per-step cast)

    # Keep the output block lane-dense: pad D up to the next multiple of 128 if needed.
    Dp = _lane_pad(D)
    if Dp != D:
        w_cat = jnp.pad(w_cat, ((0, 0), (0, Dp - D)))
        pe = jnp.pad(pe, ((0, 0), (0, Dp - D)))

    vmem_limit = _vmem_limit_bytes()
    resident = (_sublane_pad(3 * C) * Dp * w_cat.dtype.itemsize   # conv weight
                + _sublane_pad(L) * Dp * 4)                        # f32 PE table
    tile_budget = max(vmem_limit - resident - (2 << 20), 1 << 20)
    tb = _pick_block_rows(N, L, 3 * C, Dp, x.dtype.itemsize, tile_budget)
    grid = (pl.cdiv(N, tb),)       # ragged last block is fine: output stores are masked

    out = pl.pallas_call(
        _embed_kernel,
        out_shape=jax.ShapeDtypeStruct((N, L, Dp), x.dtype),
        grid=grid,
        in_specs=[
            pl.BlockSpec((tb, L, 3 * C), lambda i: (i, 0, 0)),
            # Constant index maps: fetched once, stay resident across all grid steps.
            pl.BlockSpec((3 * C, Dp), lambda i: (0, 0)),
            pl.BlockSpec((L, Dp), lambda i: (0, 0)),
        ],
        out_specs=pl.BlockSpec((tb, L, Dp), lambda i: (i, 0, 0)),
        compiler_params=pltpu.CompilerParams(
            dimension_semantics=("parallel",),
            vmem_limit_bytes=vmem_limit),
    )(x_cat, w_cat, pe)

    if Dp != D:
        out = out[:, :, :D]
    out = out.reshape(B, G, L, D)
    return out[:, 0] if squeezed else out


def make_positional_table(d_model, max_len=5000):
    position = jnp.arange(max_len, dtype=jnp.float32)[:, None]
    div_term = jnp.exp(jnp.arange(0, d_model, 2, dtype=jnp.float32)
                       * -(math.log(10000.0) / d_model))
    pe = jnp.zeros((max_len, d_model), dtype=jnp.float32)
    pe = pe.at[:, 0::2].set(jnp.sin(position * div_term))
    pe = pe.at[:, 1::2].set(jnp.cos(position * div_term))
    return pe


def init_conv_weight(key, c_in, d_model):
    # kaiming_normal_(mode='fan_in', nonlinearity='leaky_relu', a=0) -> gain = sqrt(2)
    fan_in = c_in * 3
    std = math.sqrt(2.0) / math.sqrt(fan_in)
    return std * jax.random.normal(key, (d_model, c_in, 3), dtype=jnp.float32)


def reference(x, weight, pe_table):
    # Pure-JAX reference of the same math (f32, highest precision).
    hp = jax.lax.Precision.HIGHEST
    x4 = x[:, None] if x.ndim == 3 else x
    x4 = x4.astype(jnp.float32)
    L = x4.shape[2]
    xp = jnp.roll(x4, 1, axis=2)
    xn = jnp.roll(x4, -1, axis=2)
    y = (jnp.einsum('bglc,dc->bgld', xp, weight[:, :, 0], precision=hp)
         + jnp.einsum('bglc,dc->bgld', x4, weight[:, :, 1], precision=hp)
         + jnp.einsum('bglc,dc->bgld', xn, weight[:, :, 2], precision=hp))
    y = y + pe_table[:L][None, None]
    return y[:, 0] if x.ndim == 3 else y


if __name__ == "__main__":
    B, G, L, C_IN, D_MODEL = 2, 4, 16, 4, 128

    key = jax.random.PRNGKey(0)
    k_w, k_x = jax.random.split(key)
    weight = init_conv_weight(k_w, C_IN, D_MODEL)            # (D, C, 3), bias=False
    pe_table = make_positional_table(D_MODEL, max_len=64)    # (64, D)
    x = jax.random.normal(k_x, (B, G, L, C_IN), dtype=jnp.float32)

    ref = reference(x, weight, pe_table)

    # f32 path (matches the PyTorch module's default precision).  The grid has multiple
    # (b, g) slices per block (tb > 1), so this also locks in no cross-slice leakage.
    out = jax.block_until_ready(data_embedding(x, weight, pe_table))
    assert out.shape == (B, G, L, D_MODEL) and out.dtype == jnp.float32
    assert jnp.allclose(out, ref, atol=2e-3, rtol=2e-3)

    # bf16 I/O path: bf16 operands straight to the MXU, f32 accumulation + PE add inside.
    out_bf16 = jax.block_until_ready(
        data_embedding(x.astype(jnp.bfloat16), weight, pe_table))
    assert out_bf16.dtype == jnp.bfloat16
    assert jnp.allclose(out_bf16.astype(jnp.float32), ref, atol=1e-1, rtol=1e-1)

    # 3-D input path (B, L, C), as in the module's non-4D branch.
    out3 = jax.block_until_ready(data_embedding(x[:, 0], weight, pe_table))
    assert out3.shape == (B, L, D_MODEL)
    assert jnp.allclose(out3, ref[:, 0], atol=2e-3, rtol=2e-3)

    print("KERNEL_OK")
</pallas_src>

<mosaic_0001>
module attributes {stable_mosaic.version = 11 : i64} {
  func.func @_embed_kernel(%arg0: i32, %arg1: memref<2x16x12xf32, #tpu.memory_space<vmem>>, %arg2: memref<12x128xf32, #tpu.memory_space<vmem>>, %arg3: memref<16x128xf32, #tpu.memory_space<vmem>>, %arg4: memref<2x16x128xf32, #tpu.memory_space<vmem>>) attributes {dimension_semantics = [#tpu.dimension_semantics<parallel>], iteration_bounds = array<i64: 4>, scalar_prefetch = 0 : i64, scratch_operands = 0 : i64, tpu.core_type = #tpu.core_type<tc>, window_params = [{transform_indices = @transform_0, window_bounds = array<i64: 2, 16, 12>}, {pipeline_mode = #tpu.pipeline_mode<synchronous>, transform_indices = @transform_1, window_bounds = array<i64: 12, 128>}, {pipeline_mode = #tpu.pipeline_mode<synchronous>, transform_indices = @transform_2, window_bounds = array<i64: 16, 128>}, {transform_indices = @transform_3, window_bounds = array<i64: 2, 16, 128>}]} {
    %c0 = arith.constant 0 : index
    %c0_0 = arith.constant 0 : index
    %c0_1 = arith.constant 0 : index
    %0 = vector.load %arg1[%c0, %c0_0, %c0_1] : memref<2x16x12xf32, #tpu.memory_space<vmem>>, vector<2x16x12xf32>
    %1 = vector.shape_cast %0 : vector<2x16x12xf32> to vector<32x12xf32>
    %c0_2 = arith.constant 0 : index
    %c0_3 = arith.constant 0 : index
    %2 = vector.load %arg2[%c0_2, %c0_3] : memref<12x128xf32, #tpu.memory_space<vmem>>, vector<12x128xf32>
    %cst = arith.constant dense<0.000000e+00> : vector<32x128xf32>
    %3 = tpu.matmul %1, %2, %cst {dimension_numbers = #tpu.dot_dimension_numbers<[1], [0], [0], [1], [0, 0, 1, 1], [], []>} : vector<32x12xf32>, vector<12x128xf32>, vector<32x128xf32> -> vector<32x128xf32>
    %4 = vector.shape_cast %3 : vector<32x128xf32> to vector<2x16x128xf32>
    %c0_4 = arith.constant 0 : index
    %c0_5 = arith.constant 0 : index
    %5 = vector.load %arg3[%c0_4, %c0_5] : memref<16x128xf32, #tpu.memory_space<vmem>>, vector<16x128xf32>
    %6 = vector.shape_cast %5 : vector<16x128xf32> to vector<1x16x128xf32>
    %7 = vector.broadcast %6 : vector<1x16x128xf32> to vector<2x16x128xf32>
    %8 = arith.addf %4, %7 : vector<2x16x128xf32>
    %c0_6 = arith.constant 0 : index
    %c0_7 = arith.constant 0 : index
    %c0_8 = arith.constant 0 : index
    %9 = vector.load %arg4[%c0_6, %c0_7, %c0_8] : memref<2x16x128xf32, #tpu.memory_space<vmem>>, vector<2x16x128xf32>
    tpu.vector_store %arg4[%c0_6, %c0_7, %c0_8], %8 {strides = array<i32>} : memref<2x16x128xf32, #tpu.memory_space<vmem>>, vector<2x16x128xf32>,
    return
  }
  func.func @transform_0(%arg0: i32) -> (i32, i32, i32) {
    %c0_i32 = arith.constant 0 : i32
    %c0_i32_0 = arith.constant 0 : i32
    %c0_i32_1 = arith.constant 0 : i32
    return %arg0, %c0_i32, %c0_i32_0 : i32, i32, i32
  }
  func.func @transform_1(%arg0: i32) -> (i32, i32) {
    %c0_i32 = arith.constant 0 : i32
    %c0_i32_0 = arith.constant 0 : i32
    %c0_i32_1 = arith.constant 0 : i32
    return %c0_i32, %c0_i32_0 : i32, i32
  }
  func.func @transform_2(%arg0: i32) -> (i32, i32) {
    %c0_i32 = arith.constant 0 : i32
    %c0_i32_0 = arith.constant 0 : i32
    %c0_i32_1 = arith.constant 0 : i32
    return %c0_i32, %c0_i32_0 : i32, i32
  }
  func.func @transform_3(%arg0: i32) -> (i32, i32, i32) {
    %c0_i32 = arith.constant 0 : i32
    %c0_i32_0 = arith.constant 0 : i32
    %c0_i32_1 = arith.constant 0 : i32
    return %arg0, %c0_i32, %c0_i32_0 : i32, i32, i32
  }
}

</mosaic_0001>

<llo_original>
// kernel: tpu_custom_call.1
$region0: #{tpu_custom_call.1}
  #allocation0 [shape = 'u32[]', space=smem, size = 0x4, offset = 0x4, fixed_abs, tag = 'smem constant byte address 0x4 - core index']
  #allocation1 [shape = 'u32[144,128]{1,0:T(1,128)}', space=vmem, size = 0x12000, scoped, tag = 'internal scratch']
  %s0 = inlined_call_operand.vmem [shape: f32[8,16,12], index: 0, kind: input, shape index: {}]
  %s1 = inlined_call_operand.vmem [shape: f32[12,128], index: 1, kind: input, shape index: {}]
  %s2 = inlined_call_operand.vmem [shape: f32[16,128], index: 2, kind: input, shape index: {}]
  %s3 = inlined_call_operand.hbm [shape: f32[8,16,128], index: 3, kind: output, shape index: {}]
  %s4 = sld [smem:[#allocation0]]
  $region45: #{tpu_custom_call.1} parent=0
    _
  %s6 = ssub.s32 1, %s4
  %s7 = scalar_select 0, %s6, %s4
  $region1: #{tpu_custom_call.1} parent=0
    #allocation2 [shape = 'u8[32768]{0}', space=vmem, size = 0x8000, scoped, tag = 'output window, operand 0']
    #allocation3 [shape = 's32[2]{0}', space=sflag, size = 0x8, scoped, tag = 'scoped memory for tpu_custom_call.1']
    %8 = vsyncpa [#allocation3], 0
    %s9 = scalar_lea.sflag [#allocation3], 1
    %10 = vsyncpa %s9, 0
    loop: start=0, step=1, limit=6
    $region2: #{tpu_custom_call.1} parent=1 // loop_pre_header
      _
    $region3: #{tpu_custom_call.1} parent=1 // loop_header
      %s12 = sphi 0, %s16
      %p13 = scmp.ge.s32.totalorder %s12, 6
      %s22 = sphi 0, %s24
      %s25 = sphi 0, %s22
      %s26 = sphi 0, %s25
      %s42 = sphi 0, %s26
      %s46 = sphi 0, %s46
      %s48 = sphi 0, %s46
      %s49 = sphi 0, %s48
      %s63 = sphi 0, %s49
      %s67 = sphi 0, %s67
      %s69 = sphi 0, %s67
      %s70 = sphi 0, %s69
      %s84 = sphi 0, %s70
      %s90 = sphi 0, %s92
      %s93 = sphi 0, %s90
      %s94 = sphi 0, %s93
      %s110 = sphi 0, %s94
    $region4: #{tpu_custom_call.1} parent=1 // loop_header_branch
      %15 = sbr.rel (%p13) target = $region8
    $region5: #{tpu_custom_call.1} parent=1 // loop_body
      %s17 = ssub.s32 %s12, 1
      %s18 = ssub.s32 %s12, 2
      %s19 = sadd.s32 %s12, 1
      %s20 = ssub.s32 %s12, %s19
      %p21 = scmp.eq.s32.totalorder %s20, 0
      %s23 = sadd.s32 %s22, 1
      %s24 = scalar_select %p21, %s22, %s23
      %p27 = pneg %p21
      %p28 = scmp.eq.s32.totalorder %s12, 3
      %p29 = por %p27, %p28
      %p30 = scmp.ne.s32.totalorder %s22, %s25
      %p31 = scmp.eq.s32.totalorder %s12, 0
      %p32 = por %p30, %p31
      %p33 = scmp.ne.s32.totalorder %s22, %s25
      %p34 = scmp.eq.s32.totalorder %s17, 3
      %p35 = por %p33, %p34
      %p36 = scmp.ne.s32.totalorder %s25, %s26
      %p37 = scmp.eq.s32.totalorder %s17, 0
      %p38 = por %p36, %p37
      %p39 = scmp.ne.s32.totalorder %s25, %s26
      %p40 = scmp.eq.s32.totalorder %s18, 3
      %p41 = por %p39, %p40
      %p43 = scmp.ne.s32.totalorder %s26, %s42
      %p44 = scmp.eq.s32.totalorder %s18, 0
      %p45 = por %p43, %p44
      %s47 = sadd.s32 %s46, 1
      %p50 = scmp.eq.s32.totalorder %s12, 3
      %p51 = scmp.ne.s32.totalorder %s46, %s48
      %p52 = scmp.eq.s32.totalorder %s12, 0
      %p53 = por %p51, %p52
      %p54 = scmp.ne.s32.totalorder %s46, %s48
      %p55 = scmp.eq.s32.totalorder %s17, 3
      %p56 = por %p54, %p55
      %p57 = scmp.ne.s32.totalorder %s48, %s49
      %p58 = scmp.eq.s32.totalorder %s17, 0
      %p59 = por %p57, %p58
      %p60 = scmp.ne.s32.totalorder %s48, %s49
      %p61 = scmp.eq.s32.totalorder %s18, 3
      %p62 = por %p60, %p61
      %p64 = scmp.ne.s32.totalorder %s49, %s63
      %p65 = scmp.eq.s32.totalorder %s18, 0
      %p66 = por %p64, %p65
      %s68 = sadd.s32 %s67, 1
      %p71 = scmp.eq.s32.totalorder %s12, 3
      %p72 = scmp.ne.s32.totalorder %s67, %s69
      %p73 = scmp.eq.s32.totalorder %s12, 0
      %p74 = por %p72, %p73
      %p75 = scmp.ne.s32.totalorder %s67, %s69
      %p76 = scmp.eq.s32.totalorder %s17, 3
      %p77 = por %p75, %p76
      %p78 = scmp.ne.s32.totalorder %s69, %s70
      %p79 = scmp.eq.s32.totalorder %s17, 0
      %p80 = por %p78, %p79
      %p81 = scmp.ne.s32.totalorder %s69, %s70
      %p82 = scmp.eq.s32.totalorder %s18, 3
      %p83 = por %p81, %p82
      %p85 = scmp.ne.s32.totalorder %s70, %s84
      %p86 = scmp.eq.s32.totalorder %s18, 0
      %p87 = por %p85, %p86
      %s88 = ssub.s32 %s12, %s19
      %p89 = scmp.eq.s32.totalorder %s88, 0
      %s91 = sadd.s32 %s90, 1
      %s92 = scalar_select %p89, %s90, %s91
      %p95 = pneg %p89
      %p96 = scmp.eq.s32.totalorder %s12, 3
      %p97 = por %p95, %p96
      %p98 = scmp.ne.s32.totalorder %s90, %s93
      %p99 = scmp.eq.s32.totalorder %s12, 0
      %p100 = por %p98, %p99
      %p101 = scmp.ne.s32.totalorder %s90, %s93
      %p102 = scmp.eq.s32.totalorder %s17, 3
      %p103 = por %p101, %p102
      %p104 = scmp.ne.s32.totalorder %s93, %s94
      %p105 = scmp.eq.s32.totalorder %s17, 0
      %p106 = por %p104, %p105
      %p107 = scmp.ne.s32.totalorder %s93, %s94
      %p108 = scmp.eq.s32.totalorder %s18, 3
      %p109 = por %p107, %p108
      %p111 = scmp.ne.s32.totalorder %s94, %s110
      %p112 = scmp.eq.s32.totalorder %s18, 0
      %p113 = por %p111, %p112
      %p114 = scmp.le.s32.totalorder 1, %s12
      %p115 = scmp.lt.s32.totalorder %s12, 5
      %p116 = pnand %p114, %p115
      %p117 = pneg %p116
      // Predicated region
      $region9: #{tpu_custom_call.1} parent=5 // pred_check
        _
      $region10: #{tpu_custom_call.1} parent=5 // pred_check_branch
        %119 = sbr.rel (%p116) target = $region12
      $region11: #{tpu_custom_call.1} parent=5 // pred_region
        %s120 = ssub.s32 %s12, 1
        // Predicated region
        $region13: #{tpu_custom_call.1} parent=11 // pred_check
          %p121 = pneg %p59
        $region14: #{tpu_custom_call.1} parent=11 // pred_check_branch
          %123 = sbr.rel (%p121) target = $region16
        $region15: #{tpu_custom_call.1} parent=11 // pred_region
          _
        $region16: #{tpu_custom_call.1} parent=11 // pred_fallthru
          _
        // Predicated region
        $region17: #{tpu_custom_call.1} parent=11 // pred_check
          %p124 = pneg %p80
        $region18: #{tpu_custom_call.1} parent=11 // pred_check_branch
          %126 = sbr.rel (%p124) target = $region20
        $region19: #{tpu_custom_call.1} parent=11 // pred_region
          _
        $region20: #{tpu_custom_call.1} parent=11 // pred_fallthru
          _
      $region12: #{tpu_custom_call.1} parent=5 // pred_fallthru
        _
      %p127 = scmp.lt.s32.totalorder %s12, 4
      // Predicated region
      $region21: #{tpu_custom_call.1} parent=5 // pred_check
        %p128 = pneg %p127
      $region22: #{tpu_custom_call.1} parent=5 // pred_check_branch
        %130 = sbr.rel (%p128) target = $region24
      $region23: #{tpu_custom_call.1} parent=5 // pred_region
        // Predicated region
        $region25: #{tpu_custom_call.1} parent=23 // pred_check
          %p131 = pneg %p32
        $region26: #{tpu_custom_call.1} parent=23 // pred_check_branch
          %133 = sbr.rel (%p131) target = $region28
        $region27: #{tpu_custom_call.1} parent=23 // pred_region
          %s134 = smul.u32 2, %s12
          %p135 = scmp.lt.s32.totalorder %s134, 7
          %s136 = scalar_select %p135, %s134, 7
          %s137 = smul.addr %s136, 2
          %s138 = smul.addr %s137, 8
          %s139 = scalar_lea.vmem %s0, %s138
          %s140 = smul.u32 2, %s12
        $region28: #{tpu_custom_call.1} parent=23 // pred_fallthru
          _
      $region24: #{tpu_custom_call.1} parent=5 // pred_fallthru
        _
      %p141 = scmp.le.s32.totalorder 1, %s12
      %p142 = scmp.lt.s32.totalorder %s12, 5
      %p143 = pnand %p141, %p142
      %p144 = pneg %p143
      // Predicated region
      $region29: #{tpu_custom_call.1} parent=5 // pred_check
        _
      $region30: #{tpu_custom_call.1} parent=5 // pred_check_branch
        %146 = sbr.rel (%p143) target = $region32
      $region31: #{tpu_custom_call.1} parent=5 // pred_region
        %s147 = ssub.s32 %s12, 1
        %s148 = smul.u32 2, %s17
        %p149 = scmp.lt.s32.totalorder %s148, 7
        %s150 = scalar_select %p149, %s148, 7
        %s151 = smul.addr %s150, 2
        %s152 = smul.addr %s151, 8
        %s153 = scalar_lea.vmem %s0, %s152
        %p154 = pneg %p38
        %p155 = pneg %p35
        %p156 = pneg %p59
        %p157 = pneg %p56
        %p158 = pneg %p80
        %p159 = pneg %p77
        %p160 = pneg %p106
        %p161 = pneg %p103
        %s162 = sand.u32 %s93, 1
        %s163 = scalar_lea.sflag [#allocation3], %s162
        %s164 = sand.u32 %s93, 1
        %s165 = smul.addr %s164, 32
        %s166 = scalar_lea.vmem [#allocation2], %s165
        %s167 = smul.u32 2, %s17
        %p168 = scmp.lt.s32.totalorder %s167, 7
        %s169 = scalar_select %p168, %s167, 7
        %s170 = smul.addr %s169, 2
        %s171 = smul.addr %s170, 8
        %s172 = scalar_lea.vmem %s0, %s171
        %s173 = smul.u32 2, %s17
        %s174 = smul.u32 2, %s17
        %v175 = vld [vmem:[%s172] sm:$0xff]
        %v176 = vld [vmem:[%s172 + $0x8] sm:$0xff]
        %v177 = vld [vmem:[%s172 + $0x10] sm:$0xff]
        %v178 = vld [vmem:[%s172 + $0x18] sm:$0xff]
        %v179 = vld [vmem:[%s1] sm:$0xff]
        %v180 = vld [vmem:[%s1 + $0x8] sm:$0xf]
        %vm181 = vcmask 97280
        %v183 = vsel %vm181, %v175, 0
        %v186 = vsel %vm181, %v176, 0
        %v189 = vsel %vm181, %v177, 0
        %v192 = vsel %vm181, %v178, 0
        %vm194 = vcmask 1043456
        %v196 = vsel %vm194, %v180, 0
        %198 = vmatprep.subr.mxu0 0.0
        %199 = vmatpush1.msra.mxu0 0.0
        %200 = vmatprep.subr.mxu0 0.0
        %201 = vmatpush1.msra.mxu0 0.0
        %202 = vmatprep.subr.mxu0 0.0
        %203 = vmatpush1.msra.mxu0 0.0
        %204 = vmatprep.subr.mxu0 0.0
        %205 = vmatpush1.msra.mxu0 0.0
        %206 = vmatprep.subr.mxu0 0.0
        %207 = vmatpush1.msra.mxu0 0.0
        %208 = vmatprep.subr.mxu0 0.0
        %209 = vmatpush1.msra.mxu0 0.0
        %210 = vmatprep.subr.mxu0 0.0
        %211 = vmatpush1.msra.mxu0 0.0
        %212 = vmatprep.subr.mxu0 0.0
        %213 = vmatpush1.msra.mxu0 0.0
        %214 = vmatprep.subr.mxu0 0.0
        %215 = vmatpush1.msra.mxu0 0.0
        %216 = vmatprep.subr.mxu0 0.0
        %217 = vmatpush1.msra.mxu0 0.0
        %218 = vmatprep.subr.mxu0 0.0
        %219 = vmatpush1.msra.mxu0 0.0
        %220 = vmatprep.subr.mxu0 0.0
        %221 = vmatpush1.msra.mxu0 0.0
        %222 = vmatprep.subr.mxu0 0.0
        %223 = vmatpush1.msra.mxu0 0.0
        %224 = vmatprep.subr.mxu0 0.0
        %225 = vmatpush1.msra.mxu0 0.0
        %226 = vmatprep.subr.mxu0 0.0
        %227 = vmatpush1.msra.mxu0 %v196
        %228 = vmatprep.subr.mxu0 0.0
        %229 = vmatpush1.msra.mxu0 %v179
        %230 = vmatprep.subr.mxu0 0.0
        %231 = vmatpush2.msra.mxu0 0.0
        %232 = vmatprep.subr.mxu0 0.0
        %233 = vmatpush2.msra.mxu0 0.0
        %234 = vmatprep.subr.mxu0 0.0
        %235 = vmatpush2.msra.mxu0 0.0
        %236 = vmatprep.subr.mxu0 0.0
        %237 = vmatpush2.msra.mxu0 0.0
        %238 = vmatprep.subr.mxu0 0.0
        %239 = vmatpush2.msra.mxu0 0.0
        %240 = vmatprep.subr.mxu0 0.0
        %241 = vmatpush2.msra.mxu0 0.0
        %242 = vmatprep.subr.mxu0 0.0
        %243 = vmatpush2.msra.mxu0 0.0
        %244 = vmatprep.subr.mxu0 0.0
        %245 = vmatpush2.msra.mxu0 0.0
        %246 = vmatprep.subr.mxu0 0.0
        %247 = vmatpush2.msra.mxu0 0.0
        %248 = vmatprep.subr.mxu0 0.0
        %249 = vmatpush2.msra.mxu0 0.0
        %250 = vmatprep.subr.mxu0 0.0
        %251 = vmatpush2.msra.mxu0 0.0
        %252 = vmatprep.subr.mxu0 0.0
        %253 = vmatpush2.msra.mxu0 0.0
        %254 = vmatprep.subr.mxu0 0.0
        %255 = vmatpush2.msra.mxu0 0.0
        %256 = vmatprep.subr.mxu0 0.0
        %257 = vmatpush2.msra.mxu0 0.0
        %258 = vmatprep.subr.mxu0 0.0
        %259 = vmatpush2.msra.mxu0 0.0
        %260 = vmatprep.subr.mxu0 0.0
        %261 = vmatpush2.msra.mxu0 0.0
        %262 = vmatprep.mubr.f32.mxu0 0.0
        %263 = vmatmul.mubr.f32.gmra.mxu0 %v183
        %v264 = vpop.f32.mrf.mxu0
        %v265 = vadd.f32 0.0, %v264
        %v266 = vpop.f32.mrf.mxu0
        %267 = vmatprep.mubr.f32.mxu0 0.0
        %268 = vmatmul.mubr.f32.gmra.mxu0 %v186
        %v269 = vpop.f32.mrf.mxu0
        %v270 = vadd.f32 0.0, %v269
        %v271 = vpop.f32.mrf.mxu0
        %272 = vmatprep.mubr.f32.mxu0 0.0
        %273 = vmatmul.mubr.f32.gmra.mxu0 %v189
        %v274 = vpop.f32.mrf.mxu0
        %v275 = vadd.f32 0.0, %v274
        %v276 = vpop.f32.mrf.mxu0
        %277 = vmatprep.mubr.f32.mxu0 0.0
        %278 = vmatmul.mubr.f32.gmra.mxu0 %v192
        %v279 = vpop.f32.mrf.mxu0
        %v280 = vadd.f32 0.0, %v279
        %v281 = vpop.f32.mrf.mxu0
        %282 = vdwg.mxu0
        %v283 = vld [vmem:[%s2] sm:$0xff]
        %v284 = vld [vmem:[%s2 + $0x8] sm:$0xff]
        %v285 = vadd.f32 %v265, %v283
        %v286 = vadd.f32 %v270, %v284
        %v287 = vadd.f32 %v275, %v283
        %v288 = vadd.f32 %v280, %v284
        %289 = vst [vmem:[%s166] sm:$0xff] %v285
        %290 = vst [vmem:[%s166 + $0x8] sm:$0xff] %v286
        %291 = vst [vmem:[%s166 + $0x10] sm:$0xff] %v287
        %292 = vst [vmem:[%s166 + $0x18] sm:$0xff] %v288
        %s293 = sand.u32 %s93, 1
        %s294 = scalar_lea.sflag [#allocation3], %s293
        %s295 = sand.u32 %s93, 1
        %s296 = smul.addr %s295, 32
        %s297 = scalar_lea.vmem [#allocation2], %s296
        // Predicated region
        $region33: #{tpu_custom_call.1} parent=31 // pred_check
          %p298 = pneg %p103
        $region34: #{tpu_custom_call.1} parent=31 // pred_check_branch
          %300 = sbr.rel (%p298) target = $region36
        $region35: #{tpu_custom_call.1} parent=31 // pred_region
          %s301 = smul.u32 2, %s17
          %s303 = ssub.s32 512, 512
          %304 = vsyncadd %s294, %s303
          %s305 = smul.addr %s301, 2
          %s306 = smul.addr %s305, 128
          %s307 = scalar_lea.hbm %s3, %s306
          %s308 = sshll.u32 %s297, 4
          %s309 = int_to_ptr.vmem [resolvable:$true] %s308
          %314 = dma.vmem_to_hbm [thread:$0]  %s309, 512, %s307, %s294, 128, 128, 8
        $region36: #{tpu_custom_call.1} parent=31 // pred_fallthru
          _
      $region32: #{tpu_custom_call.1} parent=5 // pred_fallthru
        _
      %p315 = scmp.le.s32.totalorder 2, %s12
      // Predicated region
      $region37: #{tpu_custom_call.1} parent=5 // pred_check
        %p316 = pneg %p315
      $region38: #{tpu_custom_call.1} parent=5 // pred_check_branch
        %318 = sbr.rel (%p316) target = $region40
      $region39: #{tpu_custom_call.1} parent=5 // pred_region
        %s319 = ssub.s32 %s12, 2
        // Predicated region
        $region41: #{tpu_custom_call.1} parent=39 // pred_check
          %p320 = pneg %p109
        $region42: #{tpu_custom_call.1} parent=39 // pred_check_branch
          %322 = sbr.rel (%p320) target = $region44
        $region43: #{tpu_custom_call.1} parent=39 // pred_region
          %s323 = sand.u32 %s94, 1
          %s324 = scalar_lea.sflag [#allocation3], %s323
          %s325 = sand.u32 %s94, 1
          %s326 = smul.addr %s325, 32
          %s327 = scalar_lea.vmem [#allocation2], %s326
          %328 = dma.done %s324, 512
        $region44: #{tpu_custom_call.1} parent=39 // pred_fallthru
          _
      $region40: #{tpu_custom_call.1} parent=5 // pred_fallthru
        _
    $region6: #{tpu_custom_call.1} parent=1 // loop_footer
      %s16 = sadd.s32 1, %s12
    $region7: #{tpu_custom_call.1} parent=1 // loop_footer_branch
      %11 = sbr.rel target = $region3
    $region8: #{tpu_custom_call.1} parent=1 // loop_exit
      _
    %329 = vsyncpa [#allocation3], 1
    %s330 = scalar_lea.sflag [#allocation3], 1
    %331 = vsyncpa %s330, 1

</llo_original>
